<compile_context>
chip_gen: v7x
topology: tpu7x:2x2x1
jax: 0.10.0
libtpu: 0.0.40
codegen_flags: <defaults>
</compile_context>

<pallas_src>
import functools

import jax
import jax.numpy as jnp
from jax.experimental import pallas as pl
from jax.experimental.pallas import tpu as pltpu


def _adv_loss_kernel(src_ref, tgt_ref, w1_ref, b1_ref, w2_ref, b2_ref, out_ref, *, batch):
    """0.5 * (BCE(dis(src), 1) + BCE(dis(tgt), 0)).

    src_ref : (B, F)  VMEM   source features
    tgt_ref : (B, F)  VMEM   target features
    w1_ref  : (F, H)  VMEM   first linear weight
    b1_ref  : (1, H)  VMEM   first linear bias (row)
    w2_ref  : (1, H)  VMEM   second linear weight as a row (PyTorch nn.Linear(H,1).weight layout)
    b2_ref  : (1,)    SMEM   second linear bias (scalar)
    out_ref : (1,)    SMEM   scalar loss
    """
    # Stack [source; target] in VMEM -> one MXU pass over the whole 2B batch.
    x = jnp.concatenate([src_ref[...], tgt_ref[...]], axis=0)        # (2B, F)

    # Linear -> ReLU  (fp32 accumulation on the MXU).
    h = jnp.dot(x, w1_ref[...], preferred_element_type=jnp.float32) + b1_ref[...]
    h = jnp.maximum(h, 0.0)                                          # (2B, H)

    # H -> 1 projection on VPU (broadcast mul) + XLU (lane reduce); avoids an N=1 MXU op.
    logit = jnp.sum(h * w2_ref[...], axis=-1, keepdims=True) + b2_ref[0]   # (2B, 1)

    # BCE via stable softplus of a sign-selected logit:
    #   label=1 (source rows): -log(sigmoid(z))   = softplus(-z)
    #   label=0 (target rows): -log(1-sigmoid(z)) = softplus(+z)
    # softplus(z) = max(z, 0) + log(1 + exp(-|z|)); capped at 100 to track PyTorch's
    # -100 clamp on log terms (differs from PyTorch only for |logit| in ~(88, 100)).
    row = jax.lax.broadcasted_iota(jnp.int32, logit.shape, 0)
    z = jnp.where(row < batch, -logit, logit)                        # (2B, 1)
    per_row = jnp.maximum(z, 0.0) + jnp.log(1.0 + jnp.exp(-jnp.abs(z)))
    per_row = jnp.minimum(per_row, 100.0)

    # 0.5 * (mean_source + mean_target) == sum(per_row) * 0.5 / B  (both halves have B rows).
    out_ref[0] = jnp.sum(per_row) * (0.5 / batch)


def adversarial_loss(source, target, w1, b1, w2_row, b2):
    """Forward pass of the PyTorch AdversarialLoss module (scalar).

    source, target : (B, F) float32
    w1             : (F, H) float32   first linear weight (input-major layout)
    b1             : (1, H) float32   first linear bias
    w2_row         : (1, H) float32   second linear weight as a row (== nn.Linear(H,1).weight)
    b2             : (1,)   float32   second linear bias
    """
    b, _ = source.shape

    kernel = functools.partial(_adv_loss_kernel, batch=b)

    out = pl.pallas_call(
        kernel,
        out_shape=jax.ShapeDtypeStruct((1,), jnp.float32),
        in_specs=[
            pl.BlockSpec(memory_space=pltpu.MemorySpace.VMEM),   # source
            pl.BlockSpec(memory_space=pltpu.MemorySpace.VMEM),   # target
            pl.BlockSpec(memory_space=pltpu.MemorySpace.VMEM),   # W1
            pl.BlockSpec(memory_space=pltpu.MemorySpace.VMEM),   # b1 (row)
            pl.BlockSpec(memory_space=pltpu.MemorySpace.VMEM),   # w2 (row)
            pl.BlockSpec(memory_space=pltpu.MemorySpace.SMEM),   # b2 scalar
        ],
        out_specs=pl.BlockSpec(memory_space=pltpu.MemorySpace.SMEM),  # scalar loss
    )(source, target, w1, b1, w2_row, b2)
    return out[0]


def lambda_scheduler_lamb(curr_iter, gamma=1.0, max_iter=1000):
    # Value only scales gradients via ReverseLayerF; the forward output is unaffected.
    p = curr_iter / max_iter
    return 2.0 / (1.0 + jnp.exp(-gamma * p)) - 1.0


# TODO(synk): gradient-reversal (ReverseLayerF * lamb) semantics would need a custom_vjp
# around this kernel; only the forward pass is implemented here.


if __name__ == "__main__":
    B = 8    # batch per domain
    F = 32   # in_features
    H = 32   # discriminator hidden width

    key = jax.random.PRNGKey(0)
    k_src, k_tgt, k_w1, k_b1, k_w2, k_b2 = jax.random.split(key, 6)

    source = jax.random.normal(k_src, (B, F), dtype=jnp.float32)
    target = jax.random.normal(k_tgt, (B, F), dtype=jnp.float32)

    # Deterministic synthetic parameters for MLP(in_features=F, out=1), stored directly
    # in the layouts the kernel consumes (no per-call packing/transpose).
    w1 = 0.1 * jax.random.normal(k_w1, (F, H), dtype=jnp.float32)
    b1 = 0.1 * jax.random.normal(k_b1, (1, H), dtype=jnp.float32)
    w2_row = 0.1 * jax.random.normal(k_w2, (1, H), dtype=jnp.float32)   # nn.Linear(H,1).weight
    b2 = 0.1 * jax.random.normal(k_b2, (1,), dtype=jnp.float32)

    # lamb at curr_iter=0 (parity with LambdaSheduler); forward-independent.
    _ = lambda_scheduler_lamb(0)

    loss = adversarial_loss(source, target, w1, b1, w2_row, b2)
    jax.block_until_ready(loss)

    # Reference check in plain JAX, same math as the PyTorch forward (sigmoid + BCELoss
    # with the -100 log clamp).
    def ref_dis(x):
        hh = jnp.maximum(x @ w1 + b1, 0.0)
        return jax.nn.sigmoid(hh @ w2_row.T + b2)

    ref_s = jnp.mean(-jnp.maximum(jnp.log(ref_dis(source)), -100.0))
    ref_t = jnp.mean(-jnp.maximum(jnp.log(1.0 - ref_dis(target)), -100.0))
    ref = 0.5 * (ref_s + ref_t)
    assert jnp.allclose(loss, ref, rtol=1e-5, atol=1e-5), (loss, ref)

    print("KERNEL_OK")
</pallas_src>

<mosaic_0001>
module attributes {stable_mosaic.version = 11 : i64} {
  func.func @_adv_loss_kernel(%arg0: memref<8x32xf32, #tpu.memory_space<vmem>>, %arg1: memref<8x32xf32, #tpu.memory_space<vmem>>, %arg2: memref<32x32xf32, #tpu.memory_space<vmem>>, %arg3: memref<1x32xf32, #tpu.memory_space<vmem>>, %arg4: memref<1x32xf32, #tpu.memory_space<vmem>>, %arg5: memref<1xf32, #tpu.memory_space<smem>>, %arg6: memref<1xf32, #tpu.memory_space<smem>>) attributes {dimension_semantics = [], scalar_prefetch = 0 : i64, scratch_operands = 0 : i64, tpu.core_type = #tpu.core_type<tc>} {
    %c0 = arith.constant 0 : index
    %c0_0 = arith.constant 0 : index
    %0 = vector.load %arg0[%c0, %c0_0] : memref<8x32xf32, #tpu.memory_space<vmem>>, vector<8x32xf32>
    %c0_1 = arith.constant 0 : index
    %c0_2 = arith.constant 0 : index
    %1 = vector.load %arg1[%c0_1, %c0_2] : memref<8x32xf32, #tpu.memory_space<vmem>>, vector<8x32xf32>
    %2 = tpu.concatenate %0, %1 in 0 : vector<8x32xf32>, vector<8x32xf32> -> vector<16x32xf32>
    %c0_3 = arith.constant 0 : index
    %c0_4 = arith.constant 0 : index
    %3 = vector.load %arg2[%c0_3, %c0_4] : memref<32x32xf32, #tpu.memory_space<vmem>>, vector<32x32xf32>
    %cst = arith.constant dense<0.000000e+00> : vector<16x32xf32>
    %4 = tpu.matmul %2, %3, %cst {dimension_numbers = #tpu.dot_dimension_numbers<[1], [0], [0], [1], [0, 0, 1, 1], [], []>} : vector<16x32xf32>, vector<32x32xf32>, vector<16x32xf32> -> vector<16x32xf32>
    %c0_5 = arith.constant 0 : index
    %c0_6 = arith.constant 0 : index
    %5 = vector.load %arg3[%c0_5, %c0_6] : memref<1x32xf32, #tpu.memory_space<vmem>>, vector<1x32xf32>
    %6 = vector.broadcast %5 : vector<1x32xf32> to vector<16x32xf32>
    %7 = arith.addf %4, %6 : vector<16x32xf32>
    %cst_7 = arith.constant 0.000000e+00 : f32
    %8 = vector.broadcast %cst_7 : f32 to vector<16x32xf32>
    %9 = arith.maximumf %7, %8 : vector<16x32xf32>
    %c0_8 = arith.constant 0 : index
    %c0_9 = arith.constant 0 : index
    %10 = vector.load %arg4[%c0_8, %c0_9] : memref<1x32xf32, #tpu.memory_space<vmem>>, vector<1x32xf32>
    %11 = vector.broadcast %10 : vector<1x32xf32> to vector<16x32xf32>
    %12 = arith.mulf %9, %11 : vector<16x32xf32>
    %cst_10 = arith.constant dense<0.000000e+00> : vector<16xf32>
    %13 = vector.multi_reduction <add>, %12, %cst_10 [1] : vector<16x32xf32> to vector<16xf32>
    %14 = vector.shape_cast %13 : vector<16xf32> to vector<16x1xf32>
    %c0_11 = arith.constant 0 : index
    %15 = memref.load %arg5[%c0_11] : memref<1xf32, #tpu.memory_space<smem>>
    %16 = vector.broadcast %15 : f32 to vector<16x1xf32>
    %17 = arith.addf %14, %16 : vector<16x1xf32>
    %18 = tpu.iota {dimensions = array<i32: 0>} : vector<16x1xi32>
    %c8_i32 = arith.constant 8 : i32
    %19 = vector.broadcast %c8_i32 : i32 to vector<16x1xi32>
    %20 = arith.cmpi slt, %18, %19 : vector<16x1xi32>
    %cst_12 = arith.constant 0.000000e+00 : f32
    %21 = vector.broadcast %cst_12 : f32 to vector<16x1xf32>
    %22 = arith.subf %21, %17 : vector<16x1xf32>
    %23 = arith.select %20, %22, %17 : vector<16x1xi1>, vector<16x1xf32>
    %cst_13 = arith.constant 0.000000e+00 : f32
    %24 = vector.broadcast %cst_13 : f32 to vector<16x1xf32>
    %25 = arith.maximumf %23, %24 : vector<16x1xf32>
    %26 = math.absf %23 : vector<16x1xf32>
    %cst_14 = arith.constant 0.000000e+00 : f32
    %27 = vector.broadcast %cst_14 : f32 to vector<16x1xf32>
    %28 = arith.subf %27, %26 : vector<16x1xf32>
    %29 = math.exp %28 : vector<16x1xf32>
    %cst_15 = arith.constant 1.000000e+00 : f32
    %30 = vector.broadcast %cst_15 : f32 to vector<16x1xf32>
    %31 = arith.addf %30, %29 : vector<16x1xf32>
    %32 = math.log %31 : vector<16x1xf32>
    %33 = arith.addf %25, %32 : vector<16x1xf32>
    %cst_16 = arith.constant 1.000000e+02 : f32
    %34 = vector.broadcast %cst_16 : f32 to vector<16x1xf32>
    %35 = arith.minimumf %33, %34 : vector<16x1xf32>
    %36 = vector.shape_cast %35 : vector<16x1xf32> to vector<1x16x1xf32>
    %cst_17 = arith.constant dense<0.000000e+00> : vector<1xf32>
    %37 = vector.multi_reduction <add>, %36, %cst_17 [1, 2] : vector<1x16x1xf32> to vector<1xf32>
    %38 = vector.shape_cast %37 : vector<1xf32> to vector<1x1x1xf32>
    %39 = vector.extract %38[0, 0, 0] : f32 from vector<1x1x1xf32>
    %cst_18 = arith.constant 6.250000e-02 : f32
    %40 = arith.mulf %39, %cst_18 : f32
    %c0_19 = arith.constant 0 : index
    %41 = memref.load %arg6[%c0_19] : memref<1xf32, #tpu.memory_space<smem>>
    memref.store %40, %arg6[%c0_19] : memref<1xf32, #tpu.memory_space<smem>>
    return
  }
}

</mosaic_0001>

<llo_original>
// kernel: tpu_custom_call.1
$region0: #{tpu_custom_call.1}
  #allocation0 [shape = 'u32[]', space=smem, size = 0x4, offset = 0x4, fixed_abs, tag = 'smem constant byte address 0x4 - core index']
  #allocation1 [shape = 'u32[144,128]{1,0:T(1,128)}', space=vmem, size = 0x12000, scoped, tag = 'internal scratch']
  #allocation2 [shape = 'f32[1]{0:T(128)S(6)}', space=smem, size = 0x200, scoped, tag = 'scoped memory for tpu_custom_call.1']
  %s0 = inlined_call_operand.hbm [shape: f32[8,32], index: 0, kind: input, shape index: {}]
  %s1 = inlined_call_operand.hbm [shape: f32[8,32], index: 1, kind: input, shape index: {}]
  %s2 = inlined_call_operand.hbm [shape: f32[32,32], index: 2, kind: input, shape index: {}]
  %s3 = inlined_call_operand.vmem [shape: f32[1,32], index: 3, kind: input, shape index: {}]
  %s4 = inlined_call_operand.vmem [shape: f32[1,32], index: 4, kind: input, shape index: {}]
  %s5 = inlined_call_operand.<no memory space> [shape: f32[1], index: 5, kind: input, shape index: {}]
  %s6 = inlined_call_operand.hbm [shape: f32[1], index: 6, kind: output, shape index: {}]
  %s7 = sld [smem:[#allocation0]]
  $region46: #{tpu_custom_call.1} parent=0
    _
  %s9 = ssub.s32 1, %s7
  %s10 = scalar_select 0, %s9, %s7
  %11 = sst [smem:[#allocation2]] %s5
  $region1: #{tpu_custom_call.1} parent=0
    #allocation3 [shape = 'u8[4096]{0}', space=vmem, size = 0x1000, scoped, tag = 'input window, operand 0, single buffered']
    #allocation4 [shape = 's32[1]{0}', space=sflag, size = 0x4, scoped, tag = 'scoped memory for tpu_custom_call.1']
    #allocation5 [shape = 's32[1]{0}', space=sflag, size = 0x4, scoped, tag = 'scoped memory for tpu_custom_call.1']
    #allocation6 [shape = 'u8[4096]{0}', space=vmem, size = 0x1000, scoped, tag = 'input window, operand 1, single buffered']
    #allocation7 [shape = 's32[1]{0}', space=sflag, size = 0x4, scoped, tag = 'scoped memory for tpu_custom_call.1']
    #allocation8 [shape = 'u8[16384]{0}', space=vmem, size = 0x4000, scoped, tag = 'input window, operand 2, single buffered']
    #allocation9 [shape = 'u8[512]{0}', space=smem, size = 0x200, scoped, tag = 'output window, operand 0, single buffered']
    %12 = vsyncpa [#allocation4], 0
    %13 = vsyncpa [#allocation7], 0
    %14 = vsyncpa [#allocation5], 0
    // Predicated region
    $region2: #{tpu_custom_call.1} parent=1 // pred_check
      _
    $region3: #{tpu_custom_call.1} parent=1 // pred_check_branch
      %16 = sbr.rel (0) target = $region5
    $region4: #{tpu_custom_call.1} parent=1 // pred_region
      %s18 = ssub.s32 128, 128
      %19 = vsyncadd [#allocation4], %s18
      %s21 = sshll.u32 [#allocation3], 4
      %s22 = int_to_ptr.vmem [resolvable:$true] %s21
      %24 = dma.hbm_to_vmem [thread:$0]  %s0, 128, %s22, [#allocation4]
    $region5: #{tpu_custom_call.1} parent=1 // pred_fallthru
      _
    // Predicated region
    $region6: #{tpu_custom_call.1} parent=1 // pred_check
      _
    $region7: #{tpu_custom_call.1} parent=1 // pred_check_branch
      %26 = sbr.rel (0) target = $region9
    $region8: #{tpu_custom_call.1} parent=1 // pred_region
      %s28 = ssub.s32 128, 128
      %29 = vsyncadd [#allocation7], %s28
      %s31 = sshll.u32 [#allocation6], 4
      %s32 = int_to_ptr.vmem [resolvable:$true] %s31
      %34 = dma.hbm_to_vmem [thread:$0]  %s1, 128, %s32, [#allocation7]
    $region9: #{tpu_custom_call.1} parent=1 // pred_fallthru
      _
    // Predicated region
    $region10: #{tpu_custom_call.1} parent=1 // pred_check
      _
    $region11: #{tpu_custom_call.1} parent=1 // pred_check_branch
      %36 = sbr.rel (0) target = $region13
    $region12: #{tpu_custom_call.1} parent=1 // pred_region
      %s38 = ssub.s32 512, 512
      %39 = vsyncadd [#allocation7], %s38
      %s40 = sshll.u32 [#allocation8], 4
      %s41 = int_to_ptr.vmem [resolvable:$true] %s40
      %46 = dma.hbm_to_vmem [thread:$0]  %s2, 512, %s41, [#allocation7], 128, 128, 8
    $region13: #{tpu_custom_call.1} parent=1 // pred_fallthru
      _
    // Predicated region
    $region14: #{tpu_custom_call.1} parent=1 // pred_check
      _
    $region15: #{tpu_custom_call.1} parent=1 // pred_check_branch
      %48 = sbr.rel (0) target = $region17
    $region16: #{tpu_custom_call.1} parent=1 // pred_region
      _
    $region17: #{tpu_custom_call.1} parent=1 // pred_fallthru
      _
    // Predicated region
    $region18: #{tpu_custom_call.1} parent=1 // pred_check
      _
    $region19: #{tpu_custom_call.1} parent=1 // pred_check_branch
      %50 = sbr.rel (0) target = $region21
    $region20: #{tpu_custom_call.1} parent=1 // pred_region
      _
    $region21: #{tpu_custom_call.1} parent=1 // pred_fallthru
      _
    // Predicated region
    $region22: #{tpu_custom_call.1} parent=1 // pred_check
      _
    $region23: #{tpu_custom_call.1} parent=1 // pred_check_branch
      %52 = sbr.rel (0) target = $region25
    $region24: #{tpu_custom_call.1} parent=1 // pred_region
      _
    $region25: #{tpu_custom_call.1} parent=1 // pred_fallthru
      _
    // Predicated region
    $region26: #{tpu_custom_call.1} parent=1 // pred_check
      _
    $region27: #{tpu_custom_call.1} parent=1 // pred_check_branch
      %54 = sbr.rel (0) target = $region29
    $region28: #{tpu_custom_call.1} parent=1 // pred_region
      %55 = dma.done [#allocation4], 128
    $region29: #{tpu_custom_call.1} parent=1 // pred_fallthru
      _
    // Predicated region
    $region30: #{tpu_custom_call.1} parent=1 // pred_check
      _
    $region31: #{tpu_custom_call.1} parent=1 // pred_check_branch
      %57 = sbr.rel (0) target = $region33
    $region32: #{tpu_custom_call.1} parent=1 // pred_region
      %58 = dma.done [#allocation7], 128
    $region33: #{tpu_custom_call.1} parent=1 // pred_fallthru
      _
    // Predicated region
    $region34: #{tpu_custom_call.1} parent=1 // pred_check
      _
    $region35: #{tpu_custom_call.1} parent=1 // pred_check_branch
      %60 = sbr.rel (0) target = $region37
    $region36: #{tpu_custom_call.1} parent=1 // pred_region
      %61 = dma.done [#allocation7], 512
    $region37: #{tpu_custom_call.1} parent=1 // pred_fallthru
      _
    %v62 = vld [vmem:[#allocation3] sm:$0xff]
    %v63 = vld [vmem:[#allocation6] sm:$0xff]
    %v64 = vld [vmem:[#allocation8] sm:$0xff]
    %v65 = vld [vmem:[#allocation8 + $0x8] sm:$0xff]
    %v66 = vld [vmem:[#allocation8 + $0x10] sm:$0xff]
    %v67 = vld [vmem:[#allocation8 + $0x18] sm:$0xff]
    %v68 = vld [vmem:[%s3] sm:$0x1]
    %v70 = vlaneseq
    %v71 = vshrl.u32 %v70, 7
    %v72 = vsub.s32 0, %v71
    %v73 = vrot.slane %v68, %v72
    %vm75 = vcmask 261120
    %v77 = vsel %vm75, %v62, 0
    %v80 = vsel %vm75, %v63, 0
    %82 = vmatprep.subr.mxu0 0.0
    %83 = vmatpush1.msra.mxu0 %v64
    %84 = vmatprep.subr.mxu0 0.0
    %85 = vmatpush1.msra.mxu0 %v65
    %86 = vmatprep.subr.mxu0 0.0
    %87 = vmatpush1.msra.mxu0 %v66
    %88 = vmatprep.subr.mxu0 0.0
    %89 = vmatpush1.msra.mxu0 %v67
    %90 = vmatprep.subr.mxu0 0.0
    %91 = vmatpush1.msra.mxu0 0.0
    %92 = vmatprep.subr.mxu0 0.0
    %93 = vmatpush1.msra.mxu0 0.0
    %94 = vmatprep.subr.mxu0 0.0
    %95 = vmatpush1.msra.mxu0 0.0
    %96 = vmatprep.subr.mxu0 0.0
    %97 = vmatpush1.msra.mxu0 0.0
    %98 = vmatprep.subr.mxu0 0.0
    %99 = vmatpush1.msra.mxu0 0.0
    %100 = vmatprep.subr.mxu0 0.0
    %101 = vmatpush1.msra.mxu0 0.0
    %102 = vmatprep.subr.mxu0 0.0
    %103 = vmatpush1.msra.mxu0 0.0
    %104 = vmatprep.subr.mxu0 0.0
    %105 = vmatpush1.msra.mxu0 0.0
    %106 = vmatprep.subr.mxu0 0.0
    %107 = vmatpush1.msra.mxu0 0.0
    %108 = vmatprep.subr.mxu0 0.0
    %109 = vmatpush1.msra.mxu0 0.0
    %110 = vmatprep.subr.mxu0 0.0
    %111 = vmatpush1.msra.mxu0 0.0
    %112 = vmatprep.subr.mxu0 0.0
    %113 = vmatpush1.msra.mxu0 0.0
    %114 = vmatprep.subr.mxu0 0.0
    %115 = vmatpush1.msra.mxu0 0.0
    %116 = vmatprep.subr.mxu0 0.0
    %117 = vmatpush1.msra.mxu0 0.0
    %118 = vmatprep.subr.mxu0 0.0
    %119 = vmatpush1.msra.mxu0 0.0
    %120 = vmatprep.subr.mxu0 0.0
    %121 = vmatpush1.msra.mxu0 0.0
    %122 = vmatprep.subr.mxu0 0.0
    %123 = vmatpush1.msra.mxu0 0.0
    %124 = vmatprep.subr.mxu0 0.0
    %125 = vmatpush1.msra.mxu0 0.0
    %126 = vmatprep.subr.mxu0 0.0
    %127 = vmatpush1.msra.mxu0 0.0
    %128 = vmatprep.subr.mxu0 0.0
    %129 = vmatpush1.msra.mxu0 0.0
    %130 = vmatprep.subr.mxu0 0.0
    %131 = vmatpush1.msra.mxu0 0.0
    %132 = vmatprep.subr.mxu0 0.0
    %133 = vmatpush1.msra.mxu0 0.0
    %134 = vmatprep.subr.mxu0 0.0
    %135 = vmatpush1.msra.mxu0 0.0
    %136 = vmatprep.subr.mxu0 0.0
    %137 = vmatpush1.msra.mxu0 0.0
    %138 = vmatprep.subr.mxu0 0.0
    %139 = vmatpush1.msra.mxu0 0.0
    %140 = vmatprep.subr.mxu0 0.0
    %141 = vmatpush1.msra.mxu0 0.0
    %142 = vmatprep.subr.mxu0 0.0
    %143 = vmatpush1.msra.mxu0 0.0
    %144 = vmatprep.subr.mxu0 0.0
    %145 = vmatpush1.msra.mxu0 0.0
    %146 = vmatprep.mubr.f32.mxu0 0.0
    %147 = vmatmul.mubr.f32.gmra.mrb[0].mxu0 %v77
    %v148 = vpop.f32.mrb[0].mxu0
    %v149 = vadd.f32 %v73, %v148
    %v150 = vpop.f32.mrb[0].mxu0
    %151 = vmatprep.mubr.f32.mxu0 0.0
    %152 = vmatmul.mubr.f32.gmra.mrb[0].mxu0 %v80
    %v153 = vpop.f32.mrb[0].mxu0
    %v154 = vadd.f32 %v73, %v153
    %v155 = vpop.f32.mrb[0].mxu0
    %156 = vdwg.mxu0
    %v157 = vmax.f32 %v149, 0.0
    %v158 = vmax.f32 %v154, 0.0
    %v159 = vld [vmem:[%s4] sm:$0x1]
    %v161 = vlaneseq
    %v162 = vshrl.u32 %v161, 7
    %v163 = vsub.s32 0, %v162
    %v164 = vrot.slane %v159, %v163
    %v166 = vmul.f32 %v157, %v164
    %v167 = vmul.f32 %v158, %v164
    %v168 = vsel %vm75, %v166, 0.0
    %169 = vadd.xlane.f32.xlu0 %v168
    %v170 = vpop.xlane.xlu0 %169
    %v171 = vsel %vm75, %v167, 0.0
    %172 = vadd.xlane.f32.xlu0 %v171
    %v173 = vpop.xlane.xlu0 %172
    %s174 = sld [smem:[#allocation2]]
    %v175 = vstv %s174
    %v176 = vadd.f32 %v170, %v175
    %v177 = vadd.f32 %v173, %v175
    %v178 = vlaneseq
    %v179 = vshrl.u32 %v178, 7
    %v180 = vadd.s32 %v179, 8
    %vm181 = vcmp.lt.s32.totalorder %v179, 8
    %vm182 = vcmp.lt.s32.totalorder %v180, 8
    %v183 = vsub.f32 0.0, %v176
    %v184 = vsub.f32 0.0, %v177
    %v185 = vsel %vm181, %v183, %v176
    %v186 = vsel %vm182, %v184, %v177
    %v187 = vmax.f32 %v185, 0.0
    %v188 = vmax.f32 %v186, 0.0
    %v189 = vand.u32 2147483647, %v185
    %v190 = vand.u32 2147483647, %v186
    %v191 = vsub.f32 0.0, %v189
    %v192 = vsub.f32 0.0, %v190
    %v193 = vmul.f32 %v191, 1.442695
    %v194 = vpow.pop %v193
    %v195 = vmul.f32 %v192, 1.442695
    %v196 = vpow.pop %v195
    %v197 = vadd.f32 %v194, 1.0
    %v198 = vadd.f32 %v196, 1.0
    %v199 = vlog2.pop %v197
    %v200 = vmul.f32 %v199, 0.6931472
    %v201 = vlog2.pop %v198
    %v202 = vmul.f32 %v201, 0.6931472
    %v203 = vadd.f32 %v187, %v200
    %v204 = vadd.f32 %v188, %v202
    %v205 = vmin.f32 %v203, 100.0
    %v206 = vmin.f32 %v204, 100.0
    %vm207 = vcmask 7168
    %v208 = vsel %vm207, %v205, 0.0
    %v209 = vsel %vm207, %v206, 0.0
    %v210 = vadd.f32 %v208, %v209
    %211 = vadd.xlane.f32.xlu0 %v210
    %v212 = vpop.xlane.xlu0 %211
    %v213 = vrot.slane %v212, 4
    %v214 = vadd.f32 %v212, %v213
    %v215 = vrot.slane %v214, 2
    %v216 = vadd.f32 %v214, %v215
    %v217 = vrot.slane %v216, 1
    %v218 = vadd.f32 %v216, %v217
    %s219 = vtos %v218
    %s220 = smul.f32 %s219, 0.0625
    %s221 = scalar_lea.smem [#allocation9], 0
    %222 = sst [smem:[%s221]] %s220
    // Predicated region
    $region38: #{tpu_custom_call.1} parent=1 // pred_check
      _
    $region39: #{tpu_custom_call.1} parent=1 // pred_check_branch
      %224 = sbr.rel (0) target = $region41
    $region40: #{tpu_custom_call.1} parent=1 // pred_region
      %s226 = ssub.s32 16, 16
      %227 = vsyncadd [#allocation5], %s226
      %230 = dma.smem_to_hbm [#allocation9], 16, %s6, [#allocation5]
    $region41: #{tpu_custom_call.1} parent=1 // pred_fallthru
      _
    // Predicated region
    $region42: #{tpu_custom_call.1} parent=1 // pred_check
      _
    $region43: #{tpu_custom_call.1} parent=1 // pred_check_branch
      %232 = sbr.rel (0) target = $region45
    $region44: #{tpu_custom_call.1} parent=1 // pred_region
      %233 = dma.done [#allocation5], 16
    $region45: #{tpu_custom_call.1} parent=1 // pred_fallthru
      _
    %234 = sfence
    %235 = vsyncpa [#allocation4], 1
    %236 = vsyncpa [#allocation7], 1
    %237 = vsyncpa [#allocation5], 1

</llo_original>
